<compile_context>
chip_gen: v7x
topology: tpu7x:2x2x1
jax: 0.10.0
libtpu: 0.0.40
codegen_flags: <defaults>
</compile_context>

<pallas_src>
import jax
import jax.numpy as jnp
from jax.experimental import pallas as pl
from jax.experimental.pallas import tpu as pltpu


LANES = 128               # lane-dense last dim (one full vreg width)
MAX_TILE_ROWS = 2048      # (2048, 128) f32 tile = 1 MiB; ~4 MiB live double-buffered
MIN_PALLAS_BATCH = 1 << 18  # below ~256K elements, fused XLA x*w+b wins


def _scale_bias_kernel(w_ref, b_ref, x_ref, o_ref):
    # w_ref, b_ref: (1,) f32 in SMEM (scalars).  x_ref/o_ref: (tile_rows, 128)
    # in VMEM.  One vld + vmul/vadd + one vst per vreg — pure VPU, no MXU.
    w = w_ref[0]
    b = b_ref[0]
    o_ref[...] = (x_ref[...].astype(jnp.float32) * w + b).astype(o_ref.dtype)


def simple_model_forward(x, weight, bias, *,
                         min_pallas_batch=MIN_PALLAS_BATCH,
                         max_tile_rows=MAX_TILE_ROWS):
    """x: (B, 1) float; weight: (1, 1) f32; bias: (1,) f32 -> (B, 1) x.dtype."""
    B, in_f = x.shape
    assert in_f == 1 and weight.shape == (1, 1) and bias.shape == (1,)

    w_s = weight.reshape(())
    b_s = bias.reshape(())

    # Small batches: kernel launch + slab plumbing dwarfs the HBM traffic;
    # XLA's fused x*w+b is already at the roofline there.
    if B < min_pallas_batch:
        return (x * w_s + b_s).astype(x.dtype)

    # Keep the slab in the input dtype when it is a supported float type
    # (halves DMA bytes for bf16); otherwise promote to f32.
    if x.dtype in (jnp.dtype(jnp.float32), jnp.dtype(jnp.bfloat16)):
        slab_dtype = x.dtype
    else:
        slab_dtype = jnp.dtype(jnp.float32)
    itemsize = jnp.dtype(slab_dtype).itemsize

    flat = x.reshape(-1)
    if flat.dtype != slab_dtype:
        flat = flat.astype(slab_dtype)

    # Lane-dense slab: rows = ceil(B/128) rounded up to a multiple of 8
    # sublanes (at most 1023 padded elements — no pad at all if B % 1024 == 0).
    rows = -(-B // LANES)
    rows = -(-rows // 8) * 8
    padded = rows * LANES
    if padded != B:
        flat = jnp.pad(flat, (0, padded - B))
    x2d = flat.reshape(rows, LANES)

    tile_rows = min(max_tile_rows, rows)   # rows is a multiple of 8, so tile_rows is too
    num_tiles = -(-rows // tile_rows)      # final block may be partial (elementwise: fine)

    out2d = pl.pallas_call(
        _scale_bias_kernel,
        out_shape=jax.ShapeDtypeStruct((rows, LANES), slab_dtype),
        grid=(num_tiles,),
        in_specs=[
            pl.BlockSpec(memory_space=pltpu.MemorySpace.SMEM),   # weight scalar
            pl.BlockSpec(memory_space=pltpu.MemorySpace.SMEM),   # bias scalar
            pl.BlockSpec((tile_rows, LANES), lambda i: (i, 0)),  # x tile
        ],
        out_specs=pl.BlockSpec((tile_rows, LANES), lambda i: (i, 0)),
        input_output_aliases={2: 0},   # write in place over the slab when donatable
        cost_estimate=pl.CostEstimate(
            flops=2 * padded,
            transcendentals=0,
            bytes_accessed=2 * padded * itemsize),
        compiler_params=pltpu.CompilerParams(
            dimension_semantics=("parallel",)),
    )(
        weight.reshape(1).astype(jnp.float32),
        bias.reshape(1).astype(jnp.float32),
        x2d,
    )

    out = out2d.reshape(-1)
    if padded != B:
        out = out[:B]
    return out.reshape(B, 1).astype(x.dtype)


if __name__ == "__main__":
    key = jax.random.PRNGKey(0)
    kx, kw, kb = jax.random.split(key, 3)

    # Deterministic params mimicking nn.Linear's init bound
    # U(-1/sqrt(in_features), 1/sqrt(in_features)) with in_features=1.
    weight = jax.random.uniform(kw, (1, 1), dtype=jnp.float32, minval=-1.0, maxval=1.0)
    bias = jax.random.uniform(kb, (1,), dtype=jnp.float32, minval=-1.0, maxval=1.0)

    # 1) Pallas path, batch NOT a multiple of 1024: exercises the <=1023-element
    #    tail pad, a multi-step grid and a partial final block (small tile
    #    override keeps the test tiny while still running 3 grid steps).
    B = 5000
    x = jax.random.normal(kx, (B, 1), dtype=jnp.float32)
    y = simple_model_forward(x, weight, bias, min_pallas_batch=0, max_tile_rows=16)
    jax.block_until_ready(y)
    y_ref = x @ weight.T + bias
    assert y.shape == (B, 1)
    assert jnp.allclose(y, y_ref, atol=1e-6, rtol=1e-6)

    # 2) Pallas path, batch % 1024 == 0: pad-free slab, default (1 MiB-capped) tile.
    B2 = 4096
    x2 = jax.random.normal(kx, (B2, 1), dtype=jnp.float32)
    y2 = simple_model_forward(x2, weight, bias, min_pallas_batch=0)
    jax.block_until_ready(y2)
    assert jnp.allclose(y2, x2 @ weight.T + bias, atol=1e-6, rtol=1e-6)

    # 3) Default small-batch fallback (pure XLA fusion) sanity check.
    x3 = x[:8]
    y3 = simple_model_forward(x3, weight, bias)
    jax.block_until_ready(y3)
    assert jnp.allclose(y3, x3 @ weight.T + bias, atol=1e-6, rtol=1e-6)

    print("KERNEL_OK")
</pallas_src>

<mosaic_0001>
module attributes {stable_mosaic.version = 11 : i64} {
  func.func @_scale_bias_kernel(%arg0: i32, %arg1: memref<1xf32, #tpu.memory_space<smem>>, %arg2: memref<1xf32, #tpu.memory_space<smem>>, %arg3: memref<16x128xf32, #tpu.memory_space<vmem>>, %arg4: memref<16x128xf32, #tpu.memory_space<vmem>>) attributes {dimension_semantics = [#tpu.dimension_semantics<parallel>], iteration_bounds = array<i64: 3>, scalar_prefetch = 0 : i64, scratch_operands = 0 : i64, tpu.core_type = #tpu.core_type<tc>, window_params = [{transform_indices = @transform_0, window_bounds = array<i64: 1>}, {transform_indices = @transform_1, window_bounds = array<i64: 1>}, {transform_indices = @transform_2, window_bounds = array<i64: 16, 128>}, {transform_indices = @transform_3, window_bounds = array<i64: 16, 128>}]} {
    %c0 = arith.constant 0 : index
    %0 = memref.load %arg1[%c0] : memref<1xf32, #tpu.memory_space<smem>>
    %c0_0 = arith.constant 0 : index
    %1 = memref.load %arg2[%c0_0] : memref<1xf32, #tpu.memory_space<smem>>
    %c0_1 = arith.constant 0 : index
    %c0_2 = arith.constant 0 : index
    %2 = vector.load %arg3[%c0_1, %c0_2] : memref<16x128xf32, #tpu.memory_space<vmem>>, vector<16x128xf32>
    %3 = vector.broadcast %0 : f32 to vector<16x128xf32>
    %4 = arith.mulf %2, %3 : vector<16x128xf32>
    %5 = vector.broadcast %1 : f32 to vector<16x128xf32>
    %6 = arith.addf %4, %5 : vector<16x128xf32>
    %c0_3 = arith.constant 0 : index
    %c0_4 = arith.constant 0 : index
    %7 = vector.load %arg4[%c0_3, %c0_4] : memref<16x128xf32, #tpu.memory_space<vmem>>, vector<16x128xf32>
    tpu.vector_store %arg4[%c0_3, %c0_4], %6 {strides = array<i32>} : memref<16x128xf32, #tpu.memory_space<vmem>>, vector<16x128xf32>,
    return
  }
  func.func @transform_0(%arg0: i32) -> i32 {
    %c0_i32 = arith.constant 0 : i32
    %c0_i32_0 = arith.constant 0 : i32
    return %c0_i32 : i32
  }
  func.func @transform_1(%arg0: i32) -> i32 {
    %c0_i32 = arith.constant 0 : i32
    %c0_i32_0 = arith.constant 0 : i32
    return %c0_i32 : i32
  }
  func.func @transform_2(%arg0: i32) -> (i32, i32) {
    %c0_i32 = arith.constant 0 : i32
    %c0_i32_0 = arith.constant 0 : i32
    return %arg0, %c0_i32 : i32, i32
  }
  func.func @transform_3(%arg0: i32) -> (i32, i32) {
    %c0_i32 = arith.constant 0 : i32
    %c0_i32_0 = arith.constant 0 : i32
    return %arg0, %c0_i32 : i32, i32
  }
}

</mosaic_0001>

<llo_original>
// kernel: tpu_custom_call.1
$region0: #{tpu_custom_call.1}
  #allocation0 [shape = 'u32[]', space=smem, size = 0x4, offset = 0x4, fixed_abs, tag = 'smem constant byte address 0x4 - core index']
  #allocation1 [shape = 'u32[144,128]{1,0:T(1,128)}', space=vmem, size = 0x12000, scoped, tag = 'internal scratch']
  #allocation2 [shape = 'f32[1]{0:T(128)S(6)}', space=smem, size = 0x200, scoped, tag = 'scoped memory for tpu_custom_call.1']
  #allocation3 [shape = 'f32[1]{0:T(128)S(6)}', space=smem, size = 0x200, scoped, tag = 'scoped memory for tpu_custom_call.1']
  %s0 = inlined_call_operand.<no memory space> [shape: f32[1], index: 0, kind: input, shape index: {}]
  %s1 = inlined_call_operand.<no memory space> [shape: f32[1], index: 1, kind: input, shape index: {}]
  %s2 = inlined_call_operand.hbm [shape: f32[40,128], index: 2, kind: input, shape index: {}, may-alias: {2,3}]
  %s3 = inlined_call_operand.hbm [shape: f32[40,128], index: 3, kind: output, shape index: {}, may-alias: {2,3}]
  %s4 = sld [smem:[#allocation0]]
  $region49: #{tpu_custom_call.1} parent=0
    _
  %s6 = ssub.s32 1, %s4
  %s7 = scalar_select 0, %s6, %s4
  %8 = sst [smem:[#allocation2]] %s0
  %9 = sst [smem:[#allocation3]] %s1
  $region1: #{tpu_custom_call.1} parent=0
    #allocation4 [shape = 'u8[16384]{0}', space=vmem, size = 0x4000, scoped, tag = 'input window, operand 2']
    #allocation5 [shape = 's32[2]{0}', space=sflag, size = 0x8, scoped, tag = 'scoped memory for tpu_custom_call.1']
    #allocation6 [shape = 's32[2]{0}', space=sflag, size = 0x8, scoped, tag = 'scoped memory for tpu_custom_call.1']
    #allocation7 [shape = 'u8[16384]{0}', space=vmem, size = 0x4000, scoped, tag = 'output window, operand 0']
    %10 = vsyncpa [#allocation5], 0
    %s11 = scalar_lea.sflag [#allocation5], 1
    %12 = vsyncpa %s11, 0
    %13 = vsyncpa [#allocation6], 0
    %s14 = scalar_lea.sflag [#allocation6], 1
    %15 = vsyncpa %s14, 0
    loop: start=0, step=1, limit=5
    $region2: #{tpu_custom_call.1} parent=1 // loop_pre_header
      _
    $region3: #{tpu_custom_call.1} parent=1 // loop_header
      %s17 = sphi 0, %s21
      %p18 = scmp.ge.s32.totalorder %s17, 5
      %s25 = sphi 0, %s25
      %s27 = sphi 0, %s25
      %s28 = sphi 0, %s27
      %s42 = sphi 0, %s28
      %s46 = sphi 0, %s46
      %s48 = sphi 0, %s46
      %s49 = sphi 0, %s48
      %s63 = sphi 0, %s49
      %s69 = sphi 0, %s71
      %s72 = sphi 0, %s69
      %s73 = sphi 0, %s72
      %s89 = sphi 0, %s73
      %s95 = sphi 0, %s97
      %s98 = sphi 0, %s95
      %s99 = sphi 0, %s98
      %s115 = sphi 0, %s99
    $region4: #{tpu_custom_call.1} parent=1 // loop_header_branch
      %20 = sbr.rel (%p18) target = $region8
    $region5: #{tpu_custom_call.1} parent=1 // loop_body
      %s22 = ssub.s32 %s17, 1
      %s23 = ssub.s32 %s17, 2
      %s24 = sadd.s32 %s17, 1
      %s26 = sadd.s32 %s25, 1
      %p29 = scmp.eq.s32.totalorder %s17, 2
      %p30 = scmp.ne.s32.totalorder %s25, %s27
      %p31 = scmp.eq.s32.totalorder %s17, 0
      %p32 = por %p30, %p31
      %p33 = scmp.ne.s32.totalorder %s25, %s27
      %p34 = scmp.eq.s32.totalorder %s22, 2
      %p35 = por %p33, %p34
      %p36 = scmp.ne.s32.totalorder %s27, %s28
      %p37 = scmp.eq.s32.totalorder %s22, 0
      %p38 = por %p36, %p37
      %p39 = scmp.ne.s32.totalorder %s27, %s28
      %p40 = scmp.eq.s32.totalorder %s23, 2
      %p41 = por %p39, %p40
      %p43 = scmp.ne.s32.totalorder %s28, %s42
      %p44 = scmp.eq.s32.totalorder %s23, 0
      %p45 = por %p43, %p44
      %s47 = sadd.s32 %s46, 1
      %p50 = scmp.eq.s32.totalorder %s17, 2
      %p51 = scmp.ne.s32.totalorder %s46, %s48
      %p52 = scmp.eq.s32.totalorder %s17, 0
      %p53 = por %p51, %p52
      %p54 = scmp.ne.s32.totalorder %s46, %s48
      %p55 = scmp.eq.s32.totalorder %s22, 2
      %p56 = por %p54, %p55
      %p57 = scmp.ne.s32.totalorder %s48, %s49
      %p58 = scmp.eq.s32.totalorder %s22, 0
      %p59 = por %p57, %p58
      %p60 = scmp.ne.s32.totalorder %s48, %s49
      %p61 = scmp.eq.s32.totalorder %s23, 2
      %p62 = por %p60, %p61
      %p64 = scmp.ne.s32.totalorder %s49, %s63
      %p65 = scmp.eq.s32.totalorder %s23, 0
      %p66 = por %p64, %p65
      %s67 = ssub.s32 %s17, %s24
      %p68 = scmp.eq.s32.totalorder %s67, 0
      %s70 = sadd.s32 %s69, 1
      %s71 = scalar_select %p68, %s69, %s70
      %p74 = pneg %p68
      %p75 = scmp.eq.s32.totalorder %s17, 2
      %p76 = por %p74, %p75
      %p77 = scmp.ne.s32.totalorder %s69, %s72
      %p78 = scmp.eq.s32.totalorder %s17, 0
      %p79 = por %p77, %p78
      %p80 = scmp.ne.s32.totalorder %s69, %s72
      %p81 = scmp.eq.s32.totalorder %s22, 2
      %p82 = por %p80, %p81
      %p83 = scmp.ne.s32.totalorder %s72, %s73
      %p84 = scmp.eq.s32.totalorder %s22, 0
      %p85 = por %p83, %p84
      %p86 = scmp.ne.s32.totalorder %s72, %s73
      %p87 = scmp.eq.s32.totalorder %s23, 2
      %p88 = por %p86, %p87
      %p90 = scmp.ne.s32.totalorder %s73, %s89
      %p91 = scmp.eq.s32.totalorder %s23, 0
      %p92 = por %p90, %p91
      %s93 = ssub.s32 %s17, %s24
      %p94 = scmp.eq.s32.totalorder %s93, 0
      %s96 = sadd.s32 %s95, 1
      %s97 = scalar_select %p94, %s95, %s96
      %p100 = pneg %p94
      %p101 = scmp.eq.s32.totalorder %s17, 2
      %p102 = por %p100, %p101
      %p103 = scmp.ne.s32.totalorder %s95, %s98
      %p104 = scmp.eq.s32.totalorder %s17, 0
      %p105 = por %p103, %p104
      %p106 = scmp.ne.s32.totalorder %s95, %s98
      %p107 = scmp.eq.s32.totalorder %s22, 2
      %p108 = por %p106, %p107
      %p109 = scmp.ne.s32.totalorder %s98, %s99
      %p110 = scmp.eq.s32.totalorder %s22, 0
      %p111 = por %p109, %p110
      %p112 = scmp.ne.s32.totalorder %s98, %s99
      %p113 = scmp.eq.s32.totalorder %s23, 2
      %p114 = por %p112, %p113
      %p116 = scmp.ne.s32.totalorder %s99, %s115
      %p117 = scmp.eq.s32.totalorder %s23, 0
      %p118 = por %p116, %p117
      %p119 = scmp.le.s32.totalorder 1, %s17
      %p120 = scmp.lt.s32.totalorder %s17, 4
      %p121 = pnand %p119, %p120
      %p122 = pneg %p121
      // Predicated region
      $region9: #{tpu_custom_call.1} parent=5 // pred_check
        _
      $region10: #{tpu_custom_call.1} parent=5 // pred_check_branch
        %124 = sbr.rel (%p121) target = $region12
      $region11: #{tpu_custom_call.1} parent=5 // pred_region
        %s125 = ssub.s32 %s17, 1
        // Predicated region
        $region13: #{tpu_custom_call.1} parent=11 // pred_check
          %p126 = pneg %p38
        $region14: #{tpu_custom_call.1} parent=11 // pred_check_branch
          %128 = sbr.rel (%p126) target = $region16
        $region15: #{tpu_custom_call.1} parent=11 // pred_region
          _
        $region16: #{tpu_custom_call.1} parent=11 // pred_fallthru
          _
        // Predicated region
        $region17: #{tpu_custom_call.1} parent=11 // pred_check
          %p129 = pneg %p59
        $region18: #{tpu_custom_call.1} parent=11 // pred_check_branch
          %131 = sbr.rel (%p129) target = $region20
        $region19: #{tpu_custom_call.1} parent=11 // pred_region
          _
        $region20: #{tpu_custom_call.1} parent=11 // pred_fallthru
          _
      $region12: #{tpu_custom_call.1} parent=5 // pred_fallthru
        _
      %p132 = scmp.lt.s32.totalorder %s17, 3
      // Predicated region
      $region21: #{tpu_custom_call.1} parent=5 // pred_check
        %p133 = pneg %p132
      $region22: #{tpu_custom_call.1} parent=5 // pred_check_branch
        %135 = sbr.rel (%p133) target = $region24
      $region23: #{tpu_custom_call.1} parent=5 // pred_region
        // Predicated region
        $region25: #{tpu_custom_call.1} parent=23 // pred_check
          %p136 = pneg %p79
        $region26: #{tpu_custom_call.1} parent=23 // pred_check_branch
          %138 = sbr.rel (%p136) target = $region28
        $region27: #{tpu_custom_call.1} parent=23 // pred_region
          %s139 = sand.u32 %s69, 1
          %s140 = scalar_lea.sflag [#allocation5], %s139
          %s141 = sand.u32 %s69, 1
          %s142 = smul.addr %s141, 16
          %s143 = scalar_lea.vmem [#allocation4], %s142
          %s144 = smul.u32 2, %s17
          %s145 = ssub.s32 5, %s144
          %p146 = scmp.lt.s32.totalorder %s145, 2
          %s147 = scalar_select %p146, %s145, 2
          %s148 = smul.u32 128, %s147
          %s150 = ssub.s32 256, %s148
          %151 = vsyncadd %s140, %s150
          %p152 = scmp.ne.s32.totalorder 0, %s148
          %s153 = smul.addr %s144, 128
          %s154 = scalar_lea.hbm %s2, %s153
          %s155 = smul.u32 8, %s147
          %s156 = sshll.u32 %s143, 4
          %s157 = int_to_ptr.vmem [resolvable:$true] %s156
          %s158 = sshll.u32 %s155, 4
          %162 = dma.hbm_to_vmem [thread:$0]  (%p152), %s154, %s158, %s157, %s140, 128, 128, 8
        $region28: #{tpu_custom_call.1} parent=23 // pred_fallthru
          _
      $region24: #{tpu_custom_call.1} parent=5 // pred_fallthru
        _
      %p163 = scmp.le.s32.totalorder 1, %s17
      %p164 = scmp.lt.s32.totalorder %s17, 4
      %p165 = pnand %p163, %p164
      %p166 = pneg %p165
      // Predicated region
      $region29: #{tpu_custom_call.1} parent=5 // pred_check
        _
      $region30: #{tpu_custom_call.1} parent=5 // pred_check_branch
        %168 = sbr.rel (%p165) target = $region32
      $region31: #{tpu_custom_call.1} parent=5 // pred_region
        %s169 = ssub.s32 %s17, 1
        %s170 = sand.u32 %s72, 1
        %s171 = scalar_lea.sflag [#allocation5], %s170
        %s172 = sand.u32 %s72, 1
        %s173 = smul.addr %s172, 16
        %s174 = scalar_lea.vmem [#allocation4], %s173
        // Predicated region
        $region33: #{tpu_custom_call.1} parent=31 // pred_check
          %p175 = pneg %p85
        $region34: #{tpu_custom_call.1} parent=31 // pred_check_branch
          %177 = sbr.rel (%p175) target = $region36
        $region35: #{tpu_custom_call.1} parent=31 // pred_region
          %178 = dma.done %s171, 256
        $region36: #{tpu_custom_call.1} parent=31 // pred_fallthru
          _
        %p179 = pneg %p38
        %p180 = pneg %p35
        %p181 = pneg %p59
        %p182 = pneg %p56
        %s183 = sand.u32 %s72, 1
        %s184 = scalar_lea.sflag [#allocation5], %s183
        %s185 = sand.u32 %s72, 1
        %s186 = smul.addr %s185, 16
        %s187 = scalar_lea.vmem [#allocation4], %s186
        %p188 = pneg %p85
        %p189 = pneg %p82
        %p190 = pneg %p111
        %p191 = pneg %p108
        %s192 = sand.u32 %s98, 1
        %s193 = scalar_lea.sflag [#allocation6], %s192
        %s194 = sand.u32 %s98, 1
        %s195 = smul.addr %s194, 16
        %s196 = scalar_lea.vmem [#allocation7], %s195
        %s197 = smul.u32 2, %s22
        %s198 = ssub.s32 5, %s197
        %p199 = scmp.lt.s32.totalorder %s198, 2
        %s200 = scalar_select %p199, %s198, 2
        %s201 = smul.u32 128, %s200
        %s202 = smul.u32 2, %s22
        %s203 = ssub.s32 5, %s202
        %p204 = scmp.lt.s32.totalorder %s203, 2
        %s205 = scalar_select %p204, %s203, 2
        %s206 = smul.u32 128, %s205
        %s207 = sld [smem:[#allocation2]]
        %s208 = sld [smem:[#allocation3]]
        %v209 = vld [vmem:[%s174] sm:$0xff]
        %v210 = vld [vmem:[%s174 + $0x8] sm:$0xff]
        %v211 = vstv %s207
        %v212 = vmul.f32 %v209, %v211
        %v213 = vmul.f32 %v210, %v211
        %v214 = vstv %s208
        %v215 = vadd.f32 %v212, %v214
        %v216 = vadd.f32 %v213, %v214
        %217 = vst [vmem:[%s196] sm:$0xff] %v215
        %218 = vst [vmem:[%s196 + $0x8] sm:$0xff] %v216
        %s219 = sand.u32 %s98, 1
        %s220 = scalar_lea.sflag [#allocation6], %s219
        %s221 = sand.u32 %s98, 1
        %s222 = smul.addr %s221, 16
        %s223 = scalar_lea.vmem [#allocation7], %s222
        // Predicated region
        $region37: #{tpu_custom_call.1} parent=31 // pred_check
          %p224 = pneg %p108
        $region38: #{tpu_custom_call.1} parent=31 // pred_check_branch
          %226 = sbr.rel (%p224) target = $region40
        $region39: #{tpu_custom_call.1} parent=31 // pred_region
          %s227 = smul.u32 2, %s22
          %s228 = ssub.s32 5, %s227
          %p229 = scmp.lt.s32.totalorder %s228, 2
          %s230 = scalar_select %p229, %s228, 2
          %s231 = smul.u32 128, %s230
          %s233 = ssub.s32 256, %s231
          %234 = vsyncadd %s220, %s233
          %p235 = scmp.ne.s32.totalorder 0, %s231
          %s236 = smul.addr %s227, 128
          %s237 = scalar_lea.hbm %s3, %s236
          %s238 = smul.u32 8, %s230
          %s239 = sshll.u32 %s223, 4
          %s240 = int_to_ptr.vmem [resolvable:$true] %s239
          %s241 = sshll.u32 %s238, 4
          %245 = dma.vmem_to_hbm [thread:$0]  (%p235), %s240, %s241, %s237, %s220, 128, 128, 8
        $region40: #{tpu_custom_call.1} parent=31 // pred_fallthru
          _
      $region32: #{tpu_custom_call.1} parent=5 // pred_fallthru
        _
      %p246 = scmp.le.s32.totalorder 2, %s17
      // Predicated region
      $region41: #{tpu_custom_call.1} parent=5 // pred_check
        %p247 = pneg %p246
      $region42: #{tpu_custom_call.1} parent=5 // pred_check_branch
        %249 = sbr.rel (%p247) target = $region44
      $region43: #{tpu_custom_call.1} parent=5 // pred_region
        %s250 = ssub.s32 %s17, 2
        // Predicated region
        $region45: #{tpu_custom_call.1} parent=43 // pred_check
          %p251 = pneg %p114
        $region46: #{tpu_custom_call.1} parent=43 // pred_check_branch
          %253 = sbr.rel (%p251) target = $region48
        $region47: #{tpu_custom_call.1} parent=43 // pred_region
          %s254 = sand.u32 %s99, 1
          %s255 = scalar_lea.sflag [#allocation6], %s254
          %s256 = sand.u32 %s99, 1
          %s257 = smul.addr %s256, 16
          %s258 = scalar_lea.vmem [#allocation7], %s257
          %259 = dma.done %s255, 256
        $region48: #{tpu_custom_call.1} parent=43 // pred_fallthru
          _
      $region44: #{tpu_custom_call.1} parent=5 // pred_fallthru
        _
    $region6: #{tpu_custom_call.1} parent=1 // loop_footer
      %s21 = sadd.s32 1, %s17
    $region7: #{tpu_custom_call.1} parent=1 // loop_footer_branch
      %16 = sbr.rel target = $region3
    $region8: #{tpu_custom_call.1} parent=1 // loop_exit
      _
    %260 = vsyncpa [#allocation5], 1
    %s261 = scalar_lea.sflag [#allocation5], 1
    %262 = vsyncpa %s261, 1
    %263 = vsyncpa [#allocation6], 1
    %s264 = scalar_lea.sflag [#allocation6], 1
    %265 = vsyncpa %s264, 1

</llo_original>
